<compile_context>
chip_gen: v6e
topology: v6e:2x2x1
jax: 0.10.0
libtpu: 0.0.40
codegen_flags: <defaults>
</compile_context>

<pallas_src>
import functools

import jax
import jax.numpy as jnp
from jax.experimental import pallas as pl
from jax.experimental.pallas import tpu as pltpu


def linear_kernel(x_ref, w_ref, b_ref, o_ref):
    # x_ref: (tm, D_in)    VMEM -- batch tile of x in natural layout
    # w_ref: (D_out, D_in) VMEM -- PyTorch-layout weight (no transpose)
    # b_ref: (1, D_out)    VMEM -- bias row, broadcast over the batch axis
    # o_ref: (tm, D_out)   VMEM -- natural-layout output tile
    acc = jax.lax.dot_general(
        x_ref[...], w_ref[...],
        dimension_numbers=(((1,), (1,)), ((), ())),   # contract D_in with D_in
        preferred_element_type=jnp.float32,
    )  # (tm, D_out) == x_tile @ W^T
    o_ref[...] = (acc + b_ref[...]).astype(o_ref.dtype)


@functools.partial(jax.jit, static_argnames=("num_tiles",))
def linear_forward(x, weight, bias, *, num_tiles=1):
    """nn.Linear forward: x (N, D_in), weight (D_out, D_in), bias (D_out,)."""
    N, D_in = x.shape
    D_out = weight.shape[0]

    # Single grid step by default.  Multi-tile (e.g. num_tiles=2 on v7x to give
    # each TensorCore one step) only when it divides N on an 8-aligned sublane
    # boundary, so no padding / slicing glue is ever needed.
    if num_tiles > 1 and N % num_tiles == 0 and (N // num_tiles) % 8 == 0:
        tiles = num_tiles
    else:
        tiles = 1
    tm = N // tiles

    b2 = bias.reshape(1, D_out)   # metadata-only reshape; lane-broadcastable row

    return pl.pallas_call(
        linear_kernel,
        out_shape=jax.ShapeDtypeStruct((N, D_out), x.dtype),
        grid_spec=pltpu.PrefetchScalarGridSpec(
            num_scalar_prefetch=0,
            grid=(tiles,),
            in_specs=[
                pl.BlockSpec((tm, D_in), lambda i: (i, 0)),       # x batch tile
                pl.BlockSpec((D_out, D_in), lambda i: (0, 0)),    # weight (resident)
                pl.BlockSpec((1, D_out), lambda i: (0, 0)),       # bias   (resident)
            ],
            out_specs=pl.BlockSpec((tm, D_out), lambda i: (i, 0)),
        ),
        compiler_params=pltpu.CompilerParams(
            dimension_semantics=("parallel",),   # independent batch tiles
        ),
    )(x, weight, b2)


if __name__ == "__main__":
    # Shapes consistent with LinearRegressionTorch(input_size=4, output_size=2).
    N, D_in, D_out = 8, 4, 2

    key = jax.random.PRNGKey(0)
    kx, kw, kb = jax.random.split(key, 3)

    x = jax.random.normal(kx, (N, D_in), dtype=jnp.float32)
    # Deterministic parameter init (mimics nn.Linear's uniform(-1/sqrt(fan_in), ...))
    bound = 1.0 / jnp.sqrt(jnp.float32(D_in))
    weight = jax.random.uniform(kw, (D_out, D_in), dtype=jnp.float32,
                                minval=-bound, maxval=bound)
    bias = jax.random.uniform(kb, (D_out,), dtype=jnp.float32,
                              minval=-bound, maxval=bound)

    # Default: single grid step (block == full array, zero glue ops).
    out = jax.block_until_ready(linear_forward(x, weight, bias))
    ref = x @ weight.T + bias
    assert out.shape == (N, D_out)
    assert jnp.allclose(out, ref, atol=1e-5, rtol=1e-5)

    # Also exercise the 2-tile path (one step per TensorCore on v7x) on a
    # slightly larger, still-small batch.
    N2 = 256
    x2 = jax.random.normal(jax.random.PRNGKey(1), (N2, D_in), dtype=jnp.float32)
    out2 = jax.block_until_ready(linear_forward(x2, weight, bias, num_tiles=2))
    ref2 = x2 @ weight.T + bias
    assert out2.shape == (N2, D_out)
    assert jnp.allclose(out2, ref2, atol=1e-5, rtol=1e-5)

    print("KERNEL_OK")
</pallas_src>

<mosaic_0001>
module attributes {stable_mosaic.version = 11 : i64} {
  func.func @linear_kernel(%arg0: i32, %arg1: memref<8x4xf32, #tpu.memory_space<vmem>>, %arg2: memref<2x4xf32, #tpu.memory_space<vmem>>, %arg3: memref<1x2xf32, #tpu.memory_space<vmem>>, %arg4: memref<8x2xf32, #tpu.memory_space<vmem>>) attributes {dimension_semantics = [#tpu.dimension_semantics<parallel>], iteration_bounds = array<i64: 1>, scalar_prefetch = 0 : i64, scratch_operands = 0 : i64, tpu.core_type = #tpu.core_type<tc>, window_params = [{transform_indices = @transform_0, window_bounds = array<i64: 8, 4>}, {pipeline_mode = #tpu.pipeline_mode<synchronous>, transform_indices = @transform_1, window_bounds = array<i64: 2, 4>}, {pipeline_mode = #tpu.pipeline_mode<synchronous>, transform_indices = @transform_2, window_bounds = array<i64: 1, 2>}, {transform_indices = @transform_3, window_bounds = array<i64: 8, 2>}]} {
    %c0 = arith.constant 0 : index
    %c0_0 = arith.constant 0 : index
    %0 = vector.load %arg1[%c0, %c0_0] : memref<8x4xf32, #tpu.memory_space<vmem>>, vector<8x4xf32>
    %c0_1 = arith.constant 0 : index
    %c0_2 = arith.constant 0 : index
    %1 = vector.load %arg2[%c0_1, %c0_2] : memref<2x4xf32, #tpu.memory_space<vmem>>, vector<2x4xf32>
    %cst = arith.constant dense<0.000000e+00> : vector<8x2xf32>
    %2 = tpu.matmul %0, %1, %cst {dimension_numbers = #tpu.dot_dimension_numbers<[1], [1], [0], [0], [0, 0, 1, 0], [], []>} : vector<8x4xf32>, vector<2x4xf32>, vector<8x2xf32> -> vector<8x2xf32>
    %c0_3 = arith.constant 0 : index
    %c0_4 = arith.constant 0 : index
    %3 = vector.load %arg3[%c0_3, %c0_4] : memref<1x2xf32, #tpu.memory_space<vmem>>, vector<1x2xf32>
    %4 = vector.broadcast %3 : vector<1x2xf32> to vector<8x2xf32>
    %5 = arith.addf %2, %4 : vector<8x2xf32>
    %c0_5 = arith.constant 0 : index
    %c0_6 = arith.constant 0 : index
    %6 = vector.load %arg4[%c0_5, %c0_6] : memref<8x2xf32, #tpu.memory_space<vmem>>, vector<8x2xf32>
    tpu.vector_store %arg4[%c0_5, %c0_6], %5 {strides = array<i32>} : memref<8x2xf32, #tpu.memory_space<vmem>>, vector<8x2xf32>,
    return
  }
  func.func @transform_0(%arg0: i32) -> (i32, i32) {
    %c0_i32 = arith.constant 0 : i32
    %c0_i32_0 = arith.constant 0 : i32
    return %arg0, %c0_i32 : i32, i32
  }
  func.func @transform_1(%arg0: i32) -> (i32, i32) {
    %c0_i32 = arith.constant 0 : i32
    %c0_i32_0 = arith.constant 0 : i32
    %c0_i32_1 = arith.constant 0 : i32
    return %c0_i32, %c0_i32_0 : i32, i32
  }
  func.func @transform_2(%arg0: i32) -> (i32, i32) {
    %c0_i32 = arith.constant 0 : i32
    %c0_i32_0 = arith.constant 0 : i32
    %c0_i32_1 = arith.constant 0 : i32
    return %c0_i32, %c0_i32_0 : i32, i32
  }
  func.func @transform_3(%arg0: i32) -> (i32, i32) {
    %c0_i32 = arith.constant 0 : i32
    %c0_i32_0 = arith.constant 0 : i32
    return %arg0, %c0_i32 : i32, i32
  }
}

</mosaic_0001>

<llo_original>
// kernel: linear_forward.1
$region0: #{linear_forward.1}
  #allocation0 [shape = 'u32[]', space=smem, size = 0x4, offset = 0x4, fixed_abs, tag = 'smem constant byte address 0x4 - core index']
  #allocation1 [shape = 'u32[144,128]{1,0:T(1,128)}', space=vmem, size = 0x12000, scoped, tag = 'internal scratch']
  %s0 = inlined_call_operand.vmem [shape: f32[8,4], index: 0, kind: input, shape index: {}]
  %s1 = inlined_call_operand.vmem [shape: f32[2,4], index: 1, kind: input, shape index: {}]
  %s2 = inlined_call_operand.vmem [shape: f32[1,2], index: 2, kind: input, shape index: {}]
  %s3 = inlined_call_operand.vmem [shape: f32[8,2], index: 3, kind: output, shape index: {}]
  %s4 = sld [smem:[#allocation0]]
  $region22: #{linear_forward.1} parent=0
    _
  %s6 = ssub.s32 1, %s4
  %s7 = scalar_select 0, %s6, %s4
  // Predicated region
  $region2: #{linear_forward.1} parent=0 // pred_check
    _
  $region3: #{linear_forward.1} parent=0 // pred_check_branch
    %9 = sbr.rel (0) target = $region5
  $region4: #{linear_forward.1} parent=0 // pred_region
    _
  $region5: #{linear_forward.1} parent=0 // pred_fallthru
    _
  // Predicated region
  $region6: #{linear_forward.1} parent=0 // pred_check
    _
  $region7: #{linear_forward.1} parent=0 // pred_check_branch
    %11 = sbr.rel (0) target = $region9
  $region8: #{linear_forward.1} parent=0 // pred_region
    _
  $region9: #{linear_forward.1} parent=0 // pred_fallthru
    _
  // Predicated region
  $region10: #{linear_forward.1} parent=0 // pred_check
    _
  $region11: #{linear_forward.1} parent=0 // pred_check_branch
    %13 = sbr.rel (0) target = $region13
  $region12: #{linear_forward.1} parent=0 // pred_region
    _
  $region13: #{linear_forward.1} parent=0 // pred_fallthru
    _
  %v14 = vld [vmem:[%s0] sm:$0xff]
  %v15 = vld [vmem:[%s1] sm:$0x3]
  %v16 = vld [vmem:[%s2] sm:$0x1]
  %v18 = vlaneseq
  %v19 = vshrl.u32 %v18, 7
  %v20 = vsub.s32 0, %v19
  %v21 = vrot.slane %v16, %v20
  %vm23 = vcmask 31744
  %v25 = vsel %vm23, %v14, 0
  %v28 = vsel %vm23, %v15, 0
  %30 = vmatprep.subr.mxu0 0.0
  %31 = vmatpush1.xpose.msra.mxu0 0.0
  %32 = vmatprep.subr.mxu0 0.0
  %33 = vmatpush1.xpose.msra.mxu0 0.0
  %34 = vmatprep.subr.mxu0 0.0
  %35 = vmatpush1.xpose.msra.mxu0 0.0
  %36 = vmatprep.subr.mxu0 0.0
  %37 = vmatpush1.xpose.msra.mxu0 0.0
  %38 = vmatprep.subr.mxu0 0.0
  %39 = vmatpush1.xpose.msra.mxu0 0.0
  %40 = vmatprep.subr.mxu0 0.0
  %41 = vmatpush1.xpose.msra.mxu0 0.0
  %42 = vmatprep.subr.mxu0 0.0
  %43 = vmatpush1.xpose.msra.mxu0 0.0
  %44 = vmatprep.subr.mxu0 0.0
  %45 = vmatpush1.xpose.msra.mxu0 0.0
  %46 = vmatprep.subr.mxu0 0.0
  %47 = vmatpush1.xpose.msra.mxu0 0.0
  %48 = vmatprep.subr.mxu0 0.0
  %49 = vmatpush1.xpose.msra.mxu0 0.0
  %50 = vmatprep.subr.mxu0 0.0
  %51 = vmatpush1.xpose.msra.mxu0 0.0
  %52 = vmatprep.subr.mxu0 0.0
  %53 = vmatpush1.xpose.msra.mxu0 0.0
  %54 = vmatprep.subr.mxu0 0.0
  %55 = vmatpush1.xpose.msra.mxu0 0.0
  %56 = vmatprep.subr.mxu0 0.0
  %57 = vmatpush1.xpose.msra.mxu0 0.0
  %58 = vmatprep.subr.mxu0 0.0
  %59 = vmatpush1.xpose.msra.mxu0 0.0
  %60 = vmatprep.subr.mxu0 0.0
  %61 = vmatpush1.xpose.msra.mxu0 %v28
  %62 = vmatprep.subr.mxu0 0.0
  %63 = vmatpush2.xpose.msra.mxu0 0.0
  %64 = vmatprep.subr.mxu0 0.0
  %65 = vmatpush2.xpose.msra.mxu0 0.0
  %66 = vmatprep.subr.mxu0 0.0
  %67 = vmatpush2.xpose.msra.mxu0 0.0
  %68 = vmatprep.subr.mxu0 0.0
  %69 = vmatpush2.xpose.msra.mxu0 0.0
  %70 = vmatprep.subr.mxu0 0.0
  %71 = vmatpush2.xpose.msra.mxu0 0.0
  %72 = vmatprep.subr.mxu0 0.0
  %73 = vmatpush2.xpose.msra.mxu0 0.0
  %74 = vmatprep.subr.mxu0 0.0
  %75 = vmatpush2.xpose.msra.mxu0 0.0
  %76 = vmatprep.subr.mxu0 0.0
  %77 = vmatpush2.xpose.msra.mxu0 0.0
  %78 = vmatprep.subr.mxu0 0.0
  %79 = vmatpush2.xpose.msra.mxu0 0.0
  %80 = vmatprep.subr.mxu0 0.0
  %81 = vmatpush2.xpose.msra.mxu0 0.0
  %82 = vmatprep.subr.mxu0 0.0
  %83 = vmatpush2.xpose.msra.mxu0 0.0
  %84 = vmatprep.subr.mxu0 0.0
  %85 = vmatpush2.xpose.msra.mxu0 0.0
  %86 = vmatprep.subr.mxu0 0.0
  %87 = vmatpush2.xpose.msra.mxu0 0.0
  %88 = vmatprep.subr.mxu0 0.0
  %89 = vmatpush2.xpose.msra.mxu0 0.0
  %90 = vmatprep.subr.mxu0 0.0
  %91 = vmatpush2.xpose.msra.mxu0 0.0
  %92 = vmatprep.subr.mxu0 0.0
  %93 = vmatpush2.xpose.msra.mxu0 0.0
  %94 = vmatprep.mubr.f32.mxu0 0.0
  %95 = vmatmul.mubr.f32.gmra.mxu0 %v25
  %v96 = vpop.f32.mrf.mxu0
  %v97 = vadd.f32 %v21, %v96
  %v98 = vpop.f32.mrf.mxu0
  %99 = vdwg.mxu0
  %vm100 = vcmask 15360
  %101 = vst.msk [vmem:[%s3] sm:$0xff] %vm100, %v97
  // Predicated region
  $region14: #{linear_forward.1} parent=0 // pred_check
    _
  $region15: #{linear_forward.1} parent=0 // pred_check_branch
    %103 = sbr.rel (0) target = $region17
  $region16: #{linear_forward.1} parent=0 // pred_region
    _
  $region17: #{linear_forward.1} parent=0 // pred_fallthru
    _
  // Predicated region
  $region18: #{linear_forward.1} parent=0 // pred_check
    _
  $region19: #{linear_forward.1} parent=0 // pred_check_branch
    %105 = sbr.rel (0) target = $region21
  $region20: #{linear_forward.1} parent=0 // pred_region
    _
  $region21: #{linear_forward.1} parent=0 // pred_fallthru
    _

</llo_original>
